<compile_context>
chip_gen: v7x
topology: tpu7x:2x2x1
jax: 0.10.0
libtpu: 0.0.40
codegen_flags: <defaults>
</compile_context>

<pallas_src>
import functools

import jax
import jax.numpy as jnp
from jax.experimental import pallas as pl
from jax.experimental.pallas import tpu as pltpu


# ----------------------------------------------------------------------------
# Per-generation knobs (VMEM budget for pipelined buffers, scoped VMEM limit)
# ----------------------------------------------------------------------------
def _device_params():
    vmem_phys = 128 * 1024 * 1024                  # v5e / v6e physical VMEM
    try:
        kind = jax.devices()[0].device_kind.lower()
        if "v7" in kind:
            vmem_phys = 64 * 1024 * 1024           # v7x: 64 MiB per TensorCore
    except Exception:
        pass
    try:
        # Prefer the exact number when the query is available on this jax.
        vmem_phys = int(pltpu.get_tpu_info().vmem_capacity_bytes)
    except Exception:
        pass
    vmem_limit = min(int(vmem_phys * 3 // 4), 100 * 1024 * 1024)
    vmem_budget = min(int(vmem_phys // 2), 64 * 1024 * 1024)
    return vmem_budget, vmem_limit


# ----------------------------------------------------------------------------
# Pallas kernels
# ----------------------------------------------------------------------------
def _gen_stats_kernel(real_ref, fake_ref, dprob_ref, out_ref,
                      diff2_acc, dot_acc, nf2_acc, nr2_acc,
                      *, b, d, tb, td, mask_rows, mask_cols):
    """Streaming generator-mode statistics.

    Grid: (row_tiles ["parallel"], feature_blocks ["arbitrary"]).
    Each row tile writes one (1, 8, 128) partial-sum block:
      [0, 0, 0] = sum((fake - real)^2)          over this row tile
      [0, 0, 1] = sum_rows cosine_similarity    over this row tile
      [0, 0, 2] = sum(-clamp(log(p_fake), -100))   (row tile 0 only)
    """
    i = pl.program_id(0)          # batch-row tile
    j = pl.program_id(1)          # feature block (reduction axis, innermost)
    ndt = pl.num_programs(1)

    @pl.when(j == 0)
    def _reset_row_accumulators():
        diff2_acc[...] = jnp.zeros_like(diff2_acc)
        dot_acc[...] = jnp.zeros_like(dot_acc)
        nf2_acc[...] = jnp.zeros_like(nf2_acc)
        nr2_acc[...] = jnp.zeros_like(nr2_acc)

    real = real_ref[...].astype(jnp.float32)      # (tb, td)
    fake = fake_ref[...].astype(jnp.float32)      # (tb, td)

    # Partial edge blocks: out-of-range elements of the VMEM buffer hold
    # garbage and must contribute exactly 0.  Masks are compiled in only
    # when the tile does not divide the array (no jnp.pad / extra HBM pass).
    if mask_rows:
        rv = (i * tb + jax.lax.broadcasted_iota(jnp.int32, (tb, 1), 0)) < b
        real = jnp.where(rv, real, 0.0)
        fake = jnp.where(rv, fake, 0.0)
    if mask_cols:
        cv = (j * td + jax.lax.broadcasted_iota(jnp.int32, (1, td), 1)) < d
        real = jnp.where(cv, real, 0.0)
        fake = jnp.where(cv, fake, 0.0)

    # Per-row partial reductions accumulated across feature blocks in
    # lane-dense 1-D f32 scratch (not lane-sparse (tb, 1) columns).
    # NOTE: MSE keeps the diff-based form on purpose (numerical stability
    # when fake ~= real); see module docstring.
    diff = fake - real
    diff2_acc[...] += jnp.sum(diff * diff, axis=1)
    dot_acc[...] += jnp.sum(fake * real, axis=1)
    nf2_acc[...] += jnp.sum(fake * fake, axis=1)
    nr2_acc[...] += jnp.sum(real * real, axis=1)

    def _lane_select(lane_idx, value, base):
        lane = jax.lax.broadcasted_iota(jnp.int32, (1, 8, 128), 2)
        subl = jax.lax.broadcasted_iota(jnp.int32, (1, 8, 128), 1)
        return jnp.where((subl == 0) & (lane == lane_idx), value, base)

    @pl.when(j == ndt - 1)
    def _finalize_row_tile():
        mse_t = jnp.sum(diff2_acc[...])
        # torch cosine_similarity clamps the *product* of norms:
        # cos = dot / max(||f|| * ||r||, eps), eps = 1e-8  ->  eps^2 = 1e-16.
        denom2 = jnp.maximum(nf2_acc[...] * nr2_acc[...], jnp.float32(1e-16))
        cos_t = jnp.sum(dot_acc[...] * jax.lax.rsqrt(denom2))
        zeros = jnp.zeros((1, 8, 128), jnp.float32)
        out_ref[...] = _lane_select(0, mse_t, _lane_select(1, cos_t, zeros))

    @pl.when((j == ndt - 1) & (i == 0))
    def _adversarial_bce():
        # BCE(disc_fake, ones) numerator; folded into the streaming kernel so
        # the tiny (1, B) tensor does not need its own pallas_call.
        p = dprob_ref[...].astype(jnp.float32)
        bce_t = jnp.sum(-jnp.maximum(jnp.log(p), -100.0))
        out_ref[...] = _lane_select(2, bce_t, out_ref[...])


def _disc_bce_kernel(preal_ref, pfake_ref, out_ref):
    """Discriminator-mode BCE numerators, one launch for both terms.

    out_ref (SMEM, (2,), f32):
      [0] sum(-clamp(log(p_real),     -100))   -> BCE vs all-ones numerator
      [1] sum(-clamp(log(1 - p_fake), -100))   -> BCE vs all-zeros numerator
    """
    pr = preal_ref[...].astype(jnp.float32)
    pf = pfake_ref[...].astype(jnp.float32)
    out_ref[0] = jnp.sum(-jnp.maximum(jnp.log(pr), -100.0))
    out_ref[1] = jnp.sum(-jnp.maximum(jnp.log(1.0 - pf), -100.0))


# ----------------------------------------------------------------------------
# Wrapper module
# ----------------------------------------------------------------------------
class TimeSeriesGANLoss:
    def __init__(self, alpha=1.0, gamma=2.0, recon_weight=1.0, adv_weight=1.0,
                 cosine_weight=0.1, use_focal=False,
                 tile_rows=None, tile_cols=None):
        self.alpha = alpha
        self.gamma = gamma
        self.recon_weight = recon_weight
        self.adv_weight = adv_weight
        self.cosine_weight = cosine_weight
        self.use_focal = use_focal
        self.tile_rows = tile_rows    # optional tuning/testing knobs
        self.tile_cols = tile_cols
        self._vmem_budget, self._vmem_limit = _device_params()

    # -- tile planning --------------------------------------------------------
    def _plan_tiles(self, b, d, itemsize):
        # Sublane packing per dtype: f32 -> 8, bf16 -> 16, int8/fp8 -> 32.
        sub = max(8, 32 // max(1, itemsize))
        # Bytes-per-step target per input block: big enough to amortize the
        # ~0.35 us/grid-step overhead, small enough that 2 inputs x 2 pipeline
        # buffers fit the per-generation VMEM budget.
        per_block = max(256 * 1024, min(8 * 1024 * 1024, self._vmem_budget // 4))

        if self.tile_cols is not None:
            td = int(self.tile_cols)
        elif d <= 128 or d * itemsize * sub <= per_block:
            td = d                                        # whole rows per block
        else:
            # Feature-tiling fallback: even a minimal (sub-row) block with the
            # full D would exceed the budget; tile D lane-aligned instead.
            td = (per_block // (sub * itemsize)) // 128 * 128
        # Sanitize feature tile: lane-aligned, never exceeding D.
        if td >= d:
            td = d
        else:
            td = max(128, (td // 128) * 128)
            if td >= d:
                td = d

        if self.tile_rows is not None:
            tb = int(self.tile_rows)
        else:
            tb = per_block // max(1, td * itemsize)
        # Sanitize row tile: sublane-aligned, never exceeding B.
        if tb >= b:
            tb = b
        else:
            tb = max(sub, (tb // sub) * sub)
            if tb >= b:
                tb = b
        return tb, td

    # -- streaming (B, D) reductions + folded adversarial BCE ----------------
    def _generator_stats(self, real2d, fake2d, dprob):
        b, d = real2d.shape
        itemsize = max(jnp.dtype(real2d.dtype).itemsize,
                       jnp.dtype(fake2d.dtype).itemsize)
        tb, td = self._plan_tiles(b, d, itemsize)
        nbt = pl.cdiv(b, tb)
        ndt = pl.cdiv(d, td)

        kernel = functools.partial(
            _gen_stats_kernel, b=b, d=d, tb=tb, td=td,
            mask_rows=(b % tb != 0), mask_cols=(d % td != 0))

        raw = pl.pallas_call(
            kernel,
            out_shape=jax.ShapeDtypeStruct((nbt, 8, 128), jnp.float32),
            grid=(nbt, ndt),
            in_specs=[
                pl.BlockSpec((tb, td), lambda i, j: (i, j)),
                pl.BlockSpec((tb, td), lambda i, j: (i, j)),
                # Tiny (1, B) disc probabilities: untiled, resident in VMEM.
                pl.BlockSpec(memory_space=pltpu.MemorySpace.VMEM),
            ],
            out_specs=pl.BlockSpec((1, 8, 128), lambda i, j: (i, 0, 0)),
            scratch_shapes=[pltpu.VMEM((tb,), jnp.float32) for _ in range(4)],
            compiler_params=pltpu.CompilerParams(
                dimension_semantics=("parallel", "arbitrary"),
                vmem_limit_bytes=self._vmem_limit,
            ),
            cost_estimate=pl.CostEstimate(
                flops=int(9 * b * d),
                transcendentals=int(b + dprob.size),
                bytes_accessed=int(b * d * 2 * itemsize + nbt * 8 * 128 * 4),
            ),
        )(real2d, fake2d, dprob)

        # Single tiny reduction over per-tile partials (better f32 accumulation
        # than one running scalar): [mse_sum, cos_sum, bce_sum].
        return jnp.sum(raw, axis=(0, 1))[:3]

    # -- merged discriminator BCE (one launch for both terms) ----------------
    def _discriminator_stats(self, preal, pfake):
        return pl.pallas_call(
            _disc_bce_kernel,
            out_shape=jax.ShapeDtypeStruct((2,), jnp.float32),
            in_specs=[pl.BlockSpec(memory_space=pltpu.MemorySpace.VMEM),
                      pl.BlockSpec(memory_space=pltpu.MemorySpace.VMEM)],
            out_specs=pl.BlockSpec(memory_space=pltpu.MemorySpace.SMEM),
        )(preal, pfake)

    # -- forward --------------------------------------------------------------
    def __call__(self, real_data, disc_real_output, disc_fake_output=None,
                 mode=None, fake_data=None, compute_adv=True):
        if mode == 'generator':
            if fake_data is None:
                raise ValueError('fake_data must be provided in generator mode')
            b = real_data.shape[0]
            real2d = real_data.reshape(b, -1)
            fake2d = fake_data.reshape(b, -1)
            d = real2d.shape[1]

            if compute_adv:
                if disc_fake_output is None:
                    raise ValueError(
                        'disc_fake_output must be provided when compute_adv=True')
                dprob = disc_fake_output.reshape(1, -1)     # lane-dense (1, B)
                n_disc = dprob.shape[1]
            else:
                # Dummy input: log(1) = 0, the bce slot is ignored below.
                dprob = jnp.ones((1, 1), jnp.float32)
                n_disc = 1

            stats = self._generator_stats(real2d, fake2d, dprob)
            recon_loss = stats[0] / float(b * d)
            cosine_loss = 1.0 - stats[1] / float(b)

            if compute_adv:
                bce_loss = stats[2] / float(n_disc)
                if self.use_focal:
                    # Scalar focal weighting stays in plain JAX (single scalar).
                    pt = jnp.exp(-bce_loss)
                    adv_loss = self.alpha * (1.0 - pt) ** self.gamma * bce_loss
                else:
                    adv_loss = bce_loss
            else:
                adv_loss = 0.0

            return (self.recon_weight * recon_loss
                    + self.adv_weight * adv_loss
                    + self.cosine_weight * cosine_loss)

        elif mode == 'discriminator':
            preal = disc_real_output.reshape(1, -1)
            pfake = disc_fake_output.reshape(1, -1)
            sums = self._discriminator_stats(preal, pfake)
            real_loss = sums[0] / float(preal.size)
            fake_loss = sums[1] / float(pfake.size)
            return (real_loss + fake_loss) / 2.0

        # Unrecognized mode -> PyTorch module falls through and returns None.
        return None


# ----------------------------------------------------------------------------
# Pure-JAX reference (mirrors PyTorch semantics, for correctness checks)
# ----------------------------------------------------------------------------
def _reference_gen(loss_mod, real, dfake, fake, compute_adv=True):
    real = real.astype(jnp.float32)
    fake = fake.astype(jnp.float32)
    recon = jnp.mean((fake - real) ** 2)
    if compute_adv:
        p = dfake.astype(jnp.float32)
        bce = jnp.mean(-jnp.maximum(jnp.log(p), -100.0))
        if loss_mod.use_focal:
            pt = jnp.exp(-bce)
            adv = loss_mod.alpha * (1.0 - pt) ** loss_mod.gamma * bce
        else:
            adv = bce
    else:
        adv = 0.0
    f2 = fake.reshape(fake.shape[0], -1)
    r2 = real.reshape(real.shape[0], -1)
    eps = 1e-8
    denom = jnp.maximum(jnp.linalg.norm(f2, axis=1) * jnp.linalg.norm(r2, axis=1),
                        eps)
    cos = jnp.sum(f2 * r2, axis=1) / denom
    cosine_loss = 1.0 - jnp.mean(cos)
    return (loss_mod.recon_weight * recon + loss_mod.adv_weight * adv
            + loss_mod.cosine_weight * cosine_loss)


def _reference_disc(dreal, dfake):
    dreal = dreal.astype(jnp.float32)
    dfake = dfake.astype(jnp.float32)
    rl = jnp.mean(-jnp.maximum(jnp.log(dreal), -100.0))
    fl = jnp.mean(-jnp.maximum(jnp.log(1.0 - dfake), -100.0))
    return (rl + fl) / 2.0


# ----------------------------------------------------------------------------
# Main
# ----------------------------------------------------------------------------
if __name__ == "__main__":
    key = jax.random.PRNGKey(0)
    k1, k2, k3, k4, k5, k6, k7 = jax.random.split(key, 7)

    # --- case 1: small shapes (B, C, T) = (2, 4, 16), f32, both modes -------
    B, C, T = 2, 4, 16
    real = jax.random.normal(k1, (B, C, T), dtype=jnp.float32)
    fake = jax.random.normal(k2, (B, C, T), dtype=jnp.float32)
    disc_real = jax.nn.sigmoid(jax.random.normal(k3, (B, 1), dtype=jnp.float32))
    disc_fake = jax.nn.sigmoid(jax.random.normal(k4, (B, 1), dtype=jnp.float32))

    loss_fn = TimeSeriesGANLoss(alpha=1.0, gamma=2.0, recon_weight=1.0,
                                adv_weight=1.0, cosine_weight=0.1,
                                use_focal=False)

    gen_loss = jax.block_until_ready(
        loss_fn(real, disc_real, disc_fake_output=disc_fake,
                mode='generator', fake_data=fake, compute_adv=True))
    disc_loss = jax.block_until_ready(
        loss_fn(real, disc_real, disc_fake_output=disc_fake,
                mode='discriminator'))
    gen_ref = _reference_gen(loss_fn, real, disc_fake, fake)
    disc_ref = _reference_disc(disc_real, disc_fake)
    assert jnp.allclose(gen_loss, gen_ref, rtol=1e-4, atol=1e-5), (gen_loss, gen_ref)
    assert jnp.allclose(disc_loss, disc_ref, rtol=1e-4, atol=1e-5), (disc_loss, disc_ref)

    # --- case 1b: compute_adv=False branch -----------------------------------
    gen_loss_na = jax.block_until_ready(
        loss_fn(real, disc_real, mode='generator', fake_data=fake,
                compute_adv=False))
    gen_ref_na = _reference_gen(loss_fn, real, disc_fake, fake, compute_adv=False)
    assert jnp.allclose(gen_loss_na, gen_ref_na, rtol=1e-4, atol=1e-5), (
        gen_loss_na, gen_ref_na)

    # --- case 2: multi-tile rows + feature tiling with partial edge blocks ---
    # B=37, D=192: tile_rows=8 -> 5 row tiles (last partial); tile_cols=128 ->
    # 2 feature blocks (last partial).  Exercises in-kernel masking and the
    # "parallel" per-row-tile output path.  Also exercises the focal branch.
    B2, C2, T2 = 37, 4, 48
    real2 = jax.random.normal(k5, (B2, C2, T2), dtype=jnp.float32)
    fake2 = jax.random.normal(k6, (B2, C2, T2), dtype=jnp.float32)
    dfake2 = jax.nn.sigmoid(jax.random.normal(k7, (B2, 1), dtype=jnp.float32))
    loss_fn2 = TimeSeriesGANLoss(alpha=0.5, gamma=2.0, recon_weight=1.0,
                                 adv_weight=0.7, cosine_weight=0.2,
                                 use_focal=True, tile_rows=8, tile_cols=128)
    gen_loss2 = jax.block_until_ready(
        loss_fn2(real2, None, disc_fake_output=dfake2, mode='generator',
                 fake_data=fake2, compute_adv=True))
    gen_ref2 = _reference_gen(loss_fn2, real2, dfake2, fake2)
    assert jnp.allclose(gen_loss2, gen_ref2, rtol=1e-4, atol=1e-5), (gen_loss2, gen_ref2)

    # --- case 3: bf16 streamed natively, default (heuristic) tiling ---------
    real_bf = real2.astype(jnp.bfloat16)
    fake_bf = fake2.astype(jnp.bfloat16)
    loss_fn3 = TimeSeriesGANLoss(alpha=0.5, gamma=2.0, recon_weight=1.0,
                                 adv_weight=0.7, cosine_weight=0.2,
                                 use_focal=True)
    gen_loss_bf = jax.block_until_ready(
        loss_fn3(real_bf, None, disc_fake_output=dfake2, mode='generator',
                 fake_data=fake_bf, compute_adv=True))
    gen_ref_bf = _reference_gen(loss_fn3, real_bf, dfake2, fake_bf)
    assert jnp.allclose(gen_loss_bf, gen_ref_bf, rtol=1e-3, atol=1e-3), (
        gen_loss_bf, gen_ref_bf)

    print("KERNEL_OK")
</pallas_src>

<mosaic_0001>
module attributes {stable_mosaic.version = 11 : i64} {
  func.func @_gen_stats_kernel(%arg0: i32, %arg1: i32, %arg2: memref<2x64xf32, #tpu.memory_space<vmem>>, %arg3: memref<2x64xf32, #tpu.memory_space<vmem>>, %arg4: memref<1x2xf32, #tpu.memory_space<vmem>>, %arg5: memref<1x8x128xf32, #tpu.memory_space<vmem>>, %arg6: memref<2xf32, #tpu.memory_space<vmem>>, %arg7: memref<2xf32, #tpu.memory_space<vmem>>, %arg8: memref<2xf32, #tpu.memory_space<vmem>>, %arg9: memref<2xf32, #tpu.memory_space<vmem>>) attributes {dimension_semantics = [#tpu.dimension_semantics<parallel>, #tpu.dimension_semantics<arbitrary>], iteration_bounds = array<i64: 1, 1>, scalar_prefetch = 0 : i64, scratch_operands = 4 : i64, tpu.core_type = #tpu.core_type<tc>, window_params = [{transform_indices = @transform_0, window_bounds = array<i64: 2, 64>}, {transform_indices = @transform_1, window_bounds = array<i64: 2, 64>}, {pipeline_mode = #tpu.pipeline_mode<synchronous>, transform_indices = @transform_2, window_bounds = array<i64: 1, 2>}, {transform_indices = @transform_3, window_bounds = array<i64: 1, 8, 128>}]} {
    %c0_i32 = arith.constant 0 : i32
    %0 = arith.cmpi eq, %arg1, %c0_i32 : i32
    %1 = arith.extui %0 : i1 to i32
    %c0_i32_0 = arith.constant 0 : i32
    %2 = arith.cmpi ne, %1, %c0_i32_0 : i32
    scf.if %2 {
      %cst_20 = arith.constant 0.000000e+00 : f32
      %34 = vector.broadcast %cst_20 : f32 to vector<2xf32>
      %c0_21 = arith.constant 0 : index
      %35 = vector.load %arg6[%c0_21] : memref<2xf32, #tpu.memory_space<vmem>>, vector<2xf32>
      tpu.vector_store %arg6[%c0_21], %34 {strides = array<i32>} : memref<2xf32, #tpu.memory_space<vmem>>, vector<2xf32>,
      %cst_22 = arith.constant 0.000000e+00 : f32
      %36 = vector.broadcast %cst_22 : f32 to vector<2xf32>
      %c0_23 = arith.constant 0 : index
      %37 = vector.load %arg7[%c0_23] : memref<2xf32, #tpu.memory_space<vmem>>, vector<2xf32>
      tpu.vector_store %arg7[%c0_23], %36 {strides = array<i32>} : memref<2xf32, #tpu.memory_space<vmem>>, vector<2xf32>,
      %cst_24 = arith.constant 0.000000e+00 : f32
      %38 = vector.broadcast %cst_24 : f32 to vector<2xf32>
      %c0_25 = arith.constant 0 : index
      %39 = vector.load %arg8[%c0_25] : memref<2xf32, #tpu.memory_space<vmem>>, vector<2xf32>
      tpu.vector_store %arg8[%c0_25], %38 {strides = array<i32>} : memref<2xf32, #tpu.memory_space<vmem>>, vector<2xf32>,
      %cst_26 = arith.constant 0.000000e+00 : f32
      %40 = vector.broadcast %cst_26 : f32 to vector<2xf32>
      %c0_27 = arith.constant 0 : index
      %41 = vector.load %arg9[%c0_27] : memref<2xf32, #tpu.memory_space<vmem>>, vector<2xf32>
      tpu.vector_store %arg9[%c0_27], %40 {strides = array<i32>} : memref<2xf32, #tpu.memory_space<vmem>>, vector<2xf32>,
    } else {
    }
    %c0 = arith.constant 0 : index
    %c0_1 = arith.constant 0 : index
    %3 = vector.load %arg2[%c0, %c0_1] : memref<2x64xf32, #tpu.memory_space<vmem>>, vector<2x64xf32>
    %c0_2 = arith.constant 0 : index
    %c0_3 = arith.constant 0 : index
    %4 = vector.load %arg3[%c0_2, %c0_3] : memref<2x64xf32, #tpu.memory_space<vmem>>, vector<2x64xf32>
    %5 = arith.subf %4, %3 : vector<2x64xf32>
    %c0_4 = arith.constant 0 : index
    %6 = vector.load %arg6[%c0_4] : memref<2xf32, #tpu.memory_space<vmem>>, vector<2xf32>
    %7 = arith.mulf %5, %5 : vector<2x64xf32>
    %cst = arith.constant dense<0.000000e+00> : vector<2xf32>
    %8 = vector.multi_reduction <add>, %7, %cst [1] : vector<2x64xf32> to vector<2xf32>
    %9 = arith.addf %6, %8 : vector<2xf32>
    %c0_5 = arith.constant 0 : index
    %10 = vector.load %arg6[%c0_5] : memref<2xf32, #tpu.memory_space<vmem>>, vector<2xf32>
    tpu.vector_store %arg6[%c0_5], %9 {strides = array<i32>} : memref<2xf32, #tpu.memory_space<vmem>>, vector<2xf32>,
    %c0_6 = arith.constant 0 : index
    %11 = vector.load %arg7[%c0_6] : memref<2xf32, #tpu.memory_space<vmem>>, vector<2xf32>
    %12 = arith.mulf %4, %3 : vector<2x64xf32>
    %cst_7 = arith.constant dense<0.000000e+00> : vector<2xf32>
    %13 = vector.multi_reduction <add>, %12, %cst_7 [1] : vector<2x64xf32> to vector<2xf32>
    %14 = arith.addf %11, %13 : vector<2xf32>
    %c0_8 = arith.constant 0 : index
    %15 = vector.load %arg7[%c0_8] : memref<2xf32, #tpu.memory_space<vmem>>, vector<2xf32>
    tpu.vector_store %arg7[%c0_8], %14 {strides = array<i32>} : memref<2xf32, #tpu.memory_space<vmem>>, vector<2xf32>,
    %c0_9 = arith.constant 0 : index
    %16 = vector.load %arg8[%c0_9] : memref<2xf32, #tpu.memory_space<vmem>>, vector<2xf32>
    %17 = arith.mulf %4, %4 : vector<2x64xf32>
    %cst_10 = arith.constant dense<0.000000e+00> : vector<2xf32>
    %18 = vector.multi_reduction <add>, %17, %cst_10 [1] : vector<2x64xf32> to vector<2xf32>
    %19 = arith.addf %16, %18 : vector<2xf32>
    %c0_11 = arith.constant 0 : index
    %20 = vector.load %arg8[%c0_11] : memref<2xf32, #tpu.memory_space<vmem>>, vector<2xf32>
    tpu.vector_store %arg8[%c0_11], %19 {strides = array<i32>} : memref<2xf32, #tpu.memory_space<vmem>>, vector<2xf32>,
    %c0_12 = arith.constant 0 : index
    %21 = vector.load %arg9[%c0_12] : memref<2xf32, #tpu.memory_space<vmem>>, vector<2xf32>
    %22 = arith.mulf %3, %3 : vector<2x64xf32>
    %cst_13 = arith.constant dense<0.000000e+00> : vector<2xf32>
    %23 = vector.multi_reduction <add>, %22, %cst_13 [1] : vector<2x64xf32> to vector<2xf32>
    %24 = arith.addf %21, %23 : vector<2xf32>
    %c0_14 = arith.constant 0 : index
    %25 = vector.load %arg9[%c0_14] : memref<2xf32, #tpu.memory_space<vmem>>, vector<2xf32>
    tpu.vector_store %arg9[%c0_14], %24 {strides = array<i32>} : memref<2xf32, #tpu.memory_space<vmem>>, vector<2xf32>,
    %c0_i32_15 = arith.constant 0 : i32
    %26 = arith.cmpi eq, %arg1, %c0_i32_15 : i32
    %27 = arith.extui %26 : i1 to i32
    %c0_i32_16 = arith.constant 0 : i32
    %28 = arith.cmpi ne, %27, %c0_i32_16 : i32
    scf.if %28 {
      %c0_20 = arith.constant 0 : index
      %34 = vector.load %arg6[%c0_20] : memref<2xf32, #tpu.memory_space<vmem>>, vector<2xf32>
      %35 = vector.shape_cast %34 : vector<2xf32> to vector<1x2xf32>
      %cst_21 = arith.constant dense<0.000000e+00> : vector<1xf32>
      %36 = vector.multi_reduction <add>, %35, %cst_21 [1] : vector<1x2xf32> to vector<1xf32>
      %37 = vector.shape_cast %36 : vector<1xf32> to vector<1x1xf32>
      %38 = vector.extract %37[0, 0] : f32 from vector<1x1xf32>
      %c0_22 = arith.constant 0 : index
      %39 = vector.load %arg8[%c0_22] : memref<2xf32, #tpu.memory_space<vmem>>, vector<2xf32>
      %c0_23 = arith.constant 0 : index
      %40 = vector.load %arg9[%c0_23] : memref<2xf32, #tpu.memory_space<vmem>>, vector<2xf32>
      %41 = arith.mulf %39, %40 : vector<2xf32>
      %cst_24 = arith.constant 1.000000e-16 : f32
      %42 = vector.broadcast %cst_24 : f32 to vector<2xf32>
      %43 = arith.maximumf %41, %42 : vector<2xf32>
      %c0_25 = arith.constant 0 : index
      %44 = vector.load %arg7[%c0_25] : memref<2xf32, #tpu.memory_space<vmem>>, vector<2xf32>
      %45 = math.rsqrt %43 : vector<2xf32>
      %46 = arith.mulf %44, %45 : vector<2xf32>
      %47 = vector.shape_cast %46 : vector<2xf32> to vector<1x2xf32>
      %cst_26 = arith.constant dense<0.000000e+00> : vector<1xf32>
      %48 = vector.multi_reduction <add>, %47, %cst_26 [1] : vector<1x2xf32> to vector<1xf32>
      %49 = vector.shape_cast %48 : vector<1xf32> to vector<1x1xf32>
      %50 = vector.extract %49[0, 0] : f32 from vector<1x1xf32>
      %cst_27 = arith.constant 0.000000e+00 : f32
      %51 = vector.broadcast %cst_27 : f32 to vector<1x8x128xf32>
      %52 = tpu.iota {dimensions = array<i32: 2>} : vector<1x8x128xi32>
      %53 = tpu.iota {dimensions = array<i32: 1>} : vector<1x8x128xi32>
      %c0_i32_28 = arith.constant 0 : i32
      %54 = vector.broadcast %c0_i32_28 : i32 to vector<1x8x128xi32>
      %55 = arith.cmpi eq, %53, %54 : vector<1x8x128xi32>
      %c1_i32 = arith.constant 1 : i32
      %56 = vector.broadcast %c1_i32 : i32 to vector<1x8x128xi32>
      %57 = arith.cmpi eq, %52, %56 : vector<1x8x128xi32>
      %58 = arith.andi %55, %57 : vector<1x8x128xi1>
      %59 = vector.broadcast %50 : f32 to vector<1x8x128xf32>
      %60 = arith.select %58, %59, %51 : vector<1x8x128xi1>, vector<1x8x128xf32>
      %61 = tpu.iota {dimensions = array<i32: 2>} : vector<1x8x128xi32>
      %62 = tpu.iota {dimensions = array<i32: 1>} : vector<1x8x128xi32>
      %c0_i32_29 = arith.constant 0 : i32
      %63 = vector.broadcast %c0_i32_29 : i32 to vector<1x8x128xi32>
      %64 = arith.cmpi eq, %62, %63 : vector<1x8x128xi32>
      %c0_i32_30 = arith.constant 0 : i32
      %65 = vector.broadcast %c0_i32_30 : i32 to vector<1x8x128xi32>
      %66 = arith.cmpi eq, %61, %65 : vector<1x8x128xi32>
      %67 = arith.andi %64, %66 : vector<1x8x128xi1>
      %68 = vector.broadcast %38 : f32 to vector<1x8x128xf32>
      %69 = arith.select %67, %68, %60 : vector<1x8x128xi1>, vector<1x8x128xf32>
      %c0_31 = arith.constant 0 : index
      %c0_32 = arith.constant 0 : index
      %c0_33 = arith.constant 0 : index
      %70 = vector.load %arg5[%c0_31, %c0_32, %c0_33] : memref<1x8x128xf32, #tpu.memory_space<vmem>>, vector<1x8x128xf32>
      tpu.vector_store %arg5[%c0_31, %c0_32, %c0_33], %69 {strides = array<i32>} : memref<1x8x128xf32, #tpu.memory_space<vmem>>, vector<1x8x128xf32>,
    } else {
    }
    %c0_i32_17 = arith.constant 0 : i32
    %29 = arith.cmpi eq, %arg1, %c0_i32_17 : i32
    %c0_i32_18 = arith.constant 0 : i32
    %30 = arith.cmpi eq, %arg0, %c0_i32_18 : i32
    %31 = arith.andi %29, %30 : i1
    %32 = arith.extui %31 : i1 to i32
    %c0_i32_19 = arith.constant 0 : i32
    %33 = arith.cmpi ne, %32, %c0_i32_19 : i32
    scf.if %33 {
      %c0_20 = arith.constant 0 : index
      %c0_21 = arith.constant 0 : index
      %34 = vector.load %arg4[%c0_20, %c0_21] : memref<1x2xf32, #tpu.memory_space<vmem>>, vector<1x2xf32>
      %35 = math.log %34 : vector<1x2xf32>
      %cst_22 = arith.constant -1.000000e+02 : f32
      %36 = vector.broadcast %cst_22 : f32 to vector<1x2xf32>
      %37 = arith.maximumf %35, %36 : vector<1x2xf32>
      %cst_23 = arith.constant 0.000000e+00 : f32
      %38 = vector.broadcast %cst_23 : f32 to vector<1x2xf32>
      %39 = arith.subf %38, %37 : vector<1x2xf32>
      %40 = vector.shape_cast %39 : vector<1x2xf32> to vector<1x1x2xf32>
      %cst_24 = arith.constant dense<0.000000e+00> : vector<1xf32>
      %41 = vector.multi_reduction <add>, %40, %cst_24 [1, 2] : vector<1x1x2xf32> to vector<1xf32>
      %42 = vector.shape_cast %41 : vector<1xf32> to vector<1x1x1xf32>
      %43 = vector.extract %42[0, 0, 0] : f32 from vector<1x1x1xf32>
      %c0_25 = arith.constant 0 : index
      %c0_26 = arith.constant 0 : index
      %c0_27 = arith.constant 0 : index
      %44 = vector.load %arg5[%c0_25, %c0_26, %c0_27] : memref<1x8x128xf32, #tpu.memory_space<vmem>>, vector<1x8x128xf32>
      %45 = tpu.iota {dimensions = array<i32: 2>} : vector<1x8x128xi32>
      %46 = tpu.iota {dimensions = array<i32: 1>} : vector<1x8x128xi32>
      %c0_i32_28 = arith.constant 0 : i32
      %47 = vector.broadcast %c0_i32_28 : i32 to vector<1x8x128xi32>
      %48 = arith.cmpi eq, %46, %47 : vector<1x8x128xi32>
      %c2_i32 = arith.constant 2 : i32
      %49 = vector.broadcast %c2_i32 : i32 to vector<1x8x128xi32>
      %50 = arith.cmpi eq, %45, %49 : vector<1x8x128xi32>
      %51 = arith.andi %48, %50 : vector<1x8x128xi1>
      %52 = vector.broadcast %43 : f32 to vector<1x8x128xf32>
      %53 = arith.select %51, %52, %44 : vector<1x8x128xi1>, vector<1x8x128xf32>
      %c0_29 = arith.constant 0 : index
      %c0_30 = arith.constant 0 : index
      %c0_31 = arith.constant 0 : index
      %54 = vector.load %arg5[%c0_29, %c0_30, %c0_31] : memref<1x8x128xf32, #tpu.memory_space<vmem>>, vector<1x8x128xf32>
      tpu.vector_store %arg5[%c0_29, %c0_30, %c0_31], %53 {strides = array<i32>} : memref<1x8x128xf32, #tpu.memory_space<vmem>>, vector<1x8x128xf32>,
    } else {
    }
    return
  }
  func.func @transform_0(%arg0: i32, %arg1: i32) -> (i32, i32) {
    %c0_i32 = arith.constant 0 : i32
    return %arg0, %arg1 : i32, i32
  }
  func.func @transform_1(%arg0: i32, %arg1: i32) -> (i32, i32) {
    %c0_i32 = arith.constant 0 : i32
    return %arg0, %arg1 : i32, i32
  }
  func.func @transform_2(%arg0: i32, %arg1: i32) -> (i32, i32) {
    %c0_i32 = arith.constant 0 : i32
    %c0_i32_0 = arith.constant 0 : i32
    %c0_i32_1 = arith.constant 0 : i32
    return %c0_i32, %c0_i32_0 : i32, i32
  }
  func.func @transform_3(%arg0: i32, %arg1: i32) -> (i32, i32, i32) {
    %c0_i32 = arith.constant 0 : i32
    %c0_i32_0 = arith.constant 0 : i32
    %c0_i32_1 = arith.constant 0 : i32
    return %arg0, %c0_i32, %c0_i32_0 : i32, i32, i32
  }
}

</mosaic_0001>

<llo_original>
// kernel: tpu_custom_call.1
$region0: #{tpu_custom_call.1}
  #allocation0 [shape = 'u32[]', space=smem, size = 0x4, offset = 0x4, fixed_abs, tag = 'smem constant byte address 0x4 - core index']
  #allocation1 [shape = 'u32[144,128]{1,0:T(1,128)}', space=vmem, size = 0x12000, scoped, tag = 'internal scratch']
  #allocation2 [shape = 'f32[2]{0:T(128)}', space=vmem, size = 0x200, scoped, tag = 'scratch operand']
  #allocation3 [shape = 'f32[2]{0:T(128)}', space=vmem, size = 0x200, scoped, tag = 'scratch operand']
  #allocation4 [shape = 'f32[2]{0:T(128)}', space=vmem, size = 0x200, scoped, tag = 'scratch operand']
  #allocation5 [shape = 'f32[2]{0:T(128)}', space=vmem, size = 0x200, scoped, tag = 'scratch operand']
  %s0 = inlined_call_operand.hbm [shape: f32[2,64], index: 0, kind: input, shape index: {}]
  %s1 = inlined_call_operand.hbm [shape: f32[2,64], index: 1, kind: input, shape index: {}]
  %s2 = inlined_call_operand.hbm [shape: f32[1,2], index: 2, kind: input, shape index: {}]
  %s3 = inlined_call_operand.hbm [shape: f32[1,8,128], index: 3, kind: output, shape index: {}]
  %s4 = sld [smem:[#allocation0]]
  $region46: #{tpu_custom_call.1} parent=0
    _
  %s6 = ssub.s32 1, %s4
  %s7 = scalar_select 0, %s6, %s4
  $region1: #{tpu_custom_call.1} parent=0
    #allocation6 [shape = 'u8[1024]{0}', space=vmem, size = 0x400, scoped, tag = 'input window, operand 0, single buffered']
    #allocation7 [shape = 's32[1]{0}', space=sflag, size = 0x4, scoped, tag = 'scoped memory for tpu_custom_call.1']
    #allocation8 [shape = 's32[1]{0}', space=sflag, size = 0x4, scoped, tag = 'scoped memory for tpu_custom_call.1']
    #allocation9 [shape = 'u8[1024]{0}', space=vmem, size = 0x400, scoped, tag = 'input window, operand 1, single buffered']
    #allocation10 [shape = 's32[1]{0}', space=sflag, size = 0x4, scoped, tag = 'scoped memory for tpu_custom_call.1']
    #allocation11 [shape = 'u8[512]{0}', space=vmem, size = 0x400, scoped, tag = 'input window, operand 2, single buffered']
    #allocation12 [shape = 'u8[4096]{0}', space=vmem, size = 0x1000, scoped, tag = 'output window, operand 0, single buffered']
    %8 = vsyncpa [#allocation7], 0
    %9 = vsyncpa [#allocation10], 0
    %10 = vsyncpa [#allocation8], 0
    // Predicated region
    $region2: #{tpu_custom_call.1} parent=1 // pred_check
      _
    $region3: #{tpu_custom_call.1} parent=1 // pred_check_branch
      %12 = sbr.rel (0) target = $region5
    $region4: #{tpu_custom_call.1} parent=1 // pred_region
      %s14 = ssub.s32 32, 32
      %15 = vsyncadd [#allocation7], %s14
      %s17 = sshll.u32 [#allocation6], 4
      %s18 = int_to_ptr.vmem [resolvable:$true] %s17
      %20 = dma.hbm_to_vmem [thread:$0]  %s0, 32, %s18, [#allocation7]
    $region5: #{tpu_custom_call.1} parent=1 // pred_fallthru
      _
    // Predicated region
    $region6: #{tpu_custom_call.1} parent=1 // pred_check
      _
    $region7: #{tpu_custom_call.1} parent=1 // pred_check_branch
      %22 = sbr.rel (0) target = $region9
    $region8: #{tpu_custom_call.1} parent=1 // pred_region
      %s24 = ssub.s32 32, 32
      %25 = vsyncadd [#allocation10], %s24
      %s27 = sshll.u32 [#allocation9], 4
      %s28 = int_to_ptr.vmem [resolvable:$true] %s27
      %30 = dma.hbm_to_vmem [thread:$0]  %s1, 32, %s28, [#allocation10]
    $region9: #{tpu_custom_call.1} parent=1 // pred_fallthru
      _
    // Predicated region
    $region10: #{tpu_custom_call.1} parent=1 // pred_check
      _
    $region11: #{tpu_custom_call.1} parent=1 // pred_check_branch
      %32 = sbr.rel (0) target = $region13
    $region12: #{tpu_custom_call.1} parent=1 // pred_region
      %s34 = ssub.s32 16, 16
      %35 = vsyncadd [#allocation10], %s34
      %s37 = sshll.u32 [#allocation11], 4
      %s38 = int_to_ptr.vmem [resolvable:$true] %s37
      %40 = dma.hbm_to_vmem [thread:$0]  %s2, 16, %s38, [#allocation10]
    $region13: #{tpu_custom_call.1} parent=1 // pred_fallthru
      _
    // Predicated region
    $region14: #{tpu_custom_call.1} parent=1 // pred_check
      _
    $region15: #{tpu_custom_call.1} parent=1 // pred_check_branch
      %42 = sbr.rel (0) target = $region17
    $region16: #{tpu_custom_call.1} parent=1 // pred_region
      %43 = dma.done [#allocation7], 32
    $region17: #{tpu_custom_call.1} parent=1 // pred_fallthru
      _
    // Predicated region
    $region18: #{tpu_custom_call.1} parent=1 // pred_check
      _
    $region19: #{tpu_custom_call.1} parent=1 // pred_check_branch
      %45 = sbr.rel (0) target = $region21
    $region20: #{tpu_custom_call.1} parent=1 // pred_region
      %46 = dma.done [#allocation10], 32
    $region21: #{tpu_custom_call.1} parent=1 // pred_fallthru
      _
    // Predicated region
    $region22: #{tpu_custom_call.1} parent=1 // pred_check
      _
    $region23: #{tpu_custom_call.1} parent=1 // pred_check_branch
      %48 = sbr.rel (0) target = $region25
    $region24: #{tpu_custom_call.1} parent=1 // pred_region
      %49 = dma.done [#allocation10], 16
    $region25: #{tpu_custom_call.1} parent=1 // pred_fallthru
      _
    %p50 = scmp.eq.s32.totalorder 0, 0
    // Predicated region
    $region26: #{tpu_custom_call.1} parent=1 // pred_check
      %p51 = pneg %p50
    $region27: #{tpu_custom_call.1} parent=1 // pred_check_branch
      %53 = sbr.rel (%p51) target = $region29
    $region28: #{tpu_custom_call.1} parent=1 // pred_region
      %v54 = vlaneseq
      %vm55 = vcmp.ge.s32.totalorder %v54, 0
      %vm56 = vcmp.lt.s32.totalorder %v54, 2
      %vm57 = vmand %vm55, %vm56
      %58 = vst.msk [vmem:[#allocation2] sm:$0x1] %vm57, 0.0
      %59 = vst.msk [vmem:[#allocation3] sm:$0x1] %vm57, 0.0
      %60 = vst.msk [vmem:[#allocation4] sm:$0x1] %vm57, 0.0
      %61 = vst.msk [vmem:[#allocation5] sm:$0x1] %vm57, 0.0
    $region29: #{tpu_custom_call.1} parent=1 // pred_fallthru
      _
    %v62 = vld [vmem:[#allocation6] sm:$0x3]
    %v63 = vld [vmem:[#allocation9] sm:$0x3]
    %v64 = vsub.f32 %v63, %v62
    %v65 = vld [vmem:[#allocation2] sm:$0x1]
    %v66 = vmul.f32 %v64, %v64
    %vm67 = vcmask 517120
    %v68 = vsel %vm67, %v66, 0.0
    %69 = vadd.xlane.f32.xlu0 %v68
    %v70 = vpop.xlane.xlu0 %69
    %v72 = vlaneseq
    %v73 = vshrl.u32 %v72, 7
    %v74 = vsub.s32 0, %v73
    %v75 = vrot.slane %v70, %v74
    %v76 = vlaneseq
    %v77 = vshrl.u32 %v76, 7
    %v78 = vsub.s32 1, %v77
    %v79 = vrot.slane %v70, %v78
    %v80 = vcombine.low %v75, %v79
    %v82 = vunpack.c.l.s4 1966171168
    %v83 = vunpack.c.0.s8 %v82
    %v84 = vlaneseq
    %v85 = vshrl.u32 %v84, 7
    %v86 = vsub.s32 %v83, %v85
    %v87 = vrot.slane %v80, %v86
    %v89 = vunpack.c.l.s4 1966171168
    %v90 = vunpack.c.0.s8 %v89
    %v91 = vlaneseq
    %v92 = vshrl.u32 %v91, 7
    %v93 = vsub.s32 %v90, %v92
    %v94 = vrot.slane %v87, %v93
    %95 = vset.pattern.permute.xlu0 0
    %96 = vperm.xlu0 %95, %v94
    %v97 = vpop.permute.xlu0 %96
    %v98 = vlaneseq
    %v99 = vand.u32 %v98, 127
    %v100 = vlaneseq
    %v101 = vshrl.u32 %v100, 7
    %v102 = vsub.s32 %v99, %v101
    %v103 = vrot.slane %v97, %v102
    %v105 = vunpack.c.l.s4 1966171168
    %v106 = vunpack.c.0.s8 %v105
    %v107 = vlaneseq
    %v108 = vshrl.u32 %v107, 7
    %v109 = vsub.s32 %v106, %v108
    %v110 = vrot.slane %v103, %v109
    %v112 = vunpack.c.l.s4 1966171168
    %v113 = vunpack.c.0.s8 %v112
    %v114 = vlaneseq
    %v115 = vshrl.u32 %v114, 7
    %v116 = vsub.s32 %v113, %v115
    %v117 = vrot.slane %v110, %v116
    %v119 = vadd.f32 %v65, %v117
    %v120 = vlaneseq
    %vm121 = vcmp.ge.s32.totalorder %v120, 0
    %vm122 = vcmp.lt.s32.totalorder %v120, 2
    %vm123 = vmand %vm121, %vm122
    %124 = vst.msk [vmem:[#allocation2] sm:$0x1] %vm123, %v119
    %v125 = vld [vmem:[#allocation3] sm:$0x1]
    %v126 = vmul.f32 %v63, %v62
    %v127 = vsel %vm67, %v126, 0.0
    %128 = vadd.xlane.f32.xlu0 %v127
    %v129 = vpop.xlane.xlu0 %128
    %v131 = vlaneseq
    %v132 = vshrl.u32 %v131, 7
    %v133 = vsub.s32 0, %v132
    %v134 = vrot.slane %v129, %v133
    %v135 = vlaneseq
    %v136 = vshrl.u32 %v135, 7
    %v137 = vsub.s32 1, %v136
    %v138 = vrot.slane %v129, %v137
    %v139 = vcombine.low %v134, %v138
    %v141 = vunpack.c.l.s4 1966171168
    %v142 = vunpack.c.0.s8 %v141
    %v143 = vlaneseq
    %v144 = vshrl.u32 %v143, 7
    %v145 = vsub.s32 %v142, %v144
    %v146 = vrot.slane %v139, %v145
    %v148 = vunpack.c.l.s4 1966171168
    %v149 = vunpack.c.0.s8 %v148
    %v150 = vlaneseq
    %v151 = vshrl.u32 %v150, 7
    %v152 = vsub.s32 %v149, %v151
    %v153 = vrot.slane %v146, %v152
    %154 = vset.pattern.permute.xlu0 0
    %155 = vperm.xlu0 %154, %v153
    %v156 = vpop.permute.xlu0 %155
    %v157 = vlaneseq
    %v158 = vshrl.u32 %v157, 7
    %v159 = vsub.s32 %v99, %v158
    %v160 = vrot.slane %v156, %v159
    %v162 = vunpack.c.l.s4 1966171168
    %v163 = vunpack.c.0.s8 %v162
    %v164 = vlaneseq
    %v165 = vshrl.u32 %v164, 7
    %v166 = vsub.s32 %v163, %v165
    %v167 = vrot.slane %v160, %v166
    %v169 = vunpack.c.l.s4 1966171168
    %v170 = vunpack.c.0.s8 %v169
    %v171 = vlaneseq
    %v172 = vshrl.u32 %v171, 7
    %v173 = vsub.s32 %v170, %v172
    %v174 = vrot.slane %v167, %v173
    %v176 = vadd.f32 %v125, %v174
    %177 = vst.msk [vmem:[#allocation3] sm:$0x1] %vm123, %v176
    %v178 = vld [vmem:[#allocation4] sm:$0x1]
    %v179 = vmul.f32 %v63, %v63
    %v180 = vsel %vm67, %v179, 0.0
    %181 = vadd.xlane.f32.xlu0 %v180
    %v182 = vpop.xlane.xlu0 %181
    %v184 = vlaneseq
    %v185 = vshrl.u32 %v184, 7
    %v186 = vsub.s32 0, %v185
    %v187 = vrot.slane %v182, %v186
    %v188 = vlaneseq
    %v189 = vshrl.u32 %v188, 7
    %v190 = vsub.s32 1, %v189
    %v191 = vrot.slane %v182, %v190
    %v192 = vcombine.low %v187, %v191
    %v194 = vunpack.c.l.s4 1966171168
    %v195 = vunpack.c.0.s8 %v194
    %v196 = vlaneseq
    %v197 = vshrl.u32 %v196, 7
    %v198 = vsub.s32 %v195, %v197
    %v199 = vrot.slane %v192, %v198
    %v201 = vunpack.c.l.s4 1966171168
    %v202 = vunpack.c.0.s8 %v201
    %v203 = vlaneseq
    %v204 = vshrl.u32 %v203, 7
    %v205 = vsub.s32 %v202, %v204
    %v206 = vrot.slane %v199, %v205
    %207 = vset.pattern.permute.xlu0 0
    %208 = vperm.xlu0 %207, %v206
    %v209 = vpop.permute.xlu0 %208
    %v210 = vlaneseq
    %v211 = vshrl.u32 %v210, 7
    %v212 = vsub.s32 %v99, %v211
    %v213 = vrot.slane %v209, %v212
    %v215 = vunpack.c.l.s4 1966171168
    %v216 = vunpack.c.0.s8 %v215
    %v217 = vlaneseq
    %v218 = vshrl.u32 %v217, 7
    %v219 = vsub.s32 %v216, %v218
    %v220 = vrot.slane %v213, %v219
    %v222 = vunpack.c.l.s4 1966171168
    %v223 = vunpack.c.0.s8 %v222
    %v224 = vlaneseq
    %v225 = vshrl.u32 %v224, 7
    %v226 = vsub.s32 %v223, %v225
    %v227 = vrot.slane %v220, %v226
    %v229 = vadd.f32 %v178, %v227
    %230 = vst.msk [vmem:[#allocation4] sm:$0x1] %vm123, %v229
    %v231 = vld [vmem:[#allocation5] sm:$0x1]
    %v232 = vmul.f32 %v62, %v62
    %v233 = vsel %vm67, %v232, 0.0
    %234 = vadd.xlane.f32.xlu0 %v233
    %v235 = vpop.xlane.xlu0 %234
    %v237 = vlaneseq
    %v238 = vshrl.u32 %v237, 7
    %v239 = vsub.s32 0, %v238
    %v240 = vrot.slane %v235, %v239
    %v241 = vlaneseq
    %v242 = vshrl.u32 %v241, 7
    %v243 = vsub.s32 1, %v242
    %v244 = vrot.slane %v235, %v243
    %v245 = vcombine.low %v240, %v244
    %v247 = vunpack.c.l.s4 1966171168
    %v248 = vunpack.c.0.s8 %v247
    %v249 = vlaneseq
    %v250 = vshrl.u32 %v249, 7
    %v251 = vsub.s32 %v248, %v250
    %v252 = vrot.slane %v245, %v251
    %v254 = vunpack.c.l.s4 1966171168
    %v255 = vunpack.c.0.s8 %v254
    %v256 = vlaneseq
    %v257 = vshrl.u32 %v256, 7
    %v258 = vsub.s32 %v255, %v257
    %v259 = vrot.slane %v252, %v258
    %260 = vset.pattern.permute.xlu0 0
    %261 = vperm.xlu0 %260, %v259
    %v262 = vpop.permute.xlu0 %261
    %v263 = vlaneseq
    %v264 = vshrl.u32 %v263, 7
    %v265 = vsub.s32 %v99, %v264
    %v266 = vrot.slane %v262, %v265
    %v268 = vunpack.c.l.s4 1966171168
    %v269 = vunpack.c.0.s8 %v268
    %v270 = vlaneseq
    %v271 = vshrl.u32 %v270, 7
    %v272 = vsub.s32 %v269, %v271
    %v273 = vrot.slane %v266, %v272
    %v275 = vunpack.c.l.s4 1966171168
    %v276 = vunpack.c.0.s8 %v275
    %v277 = vlaneseq
    %v278 = vshrl.u32 %v277, 7
    %v279 = vsub.s32 %v276, %v278
    %v280 = vrot.slane %v273, %v279
    %v282 = vadd.f32 %v231, %v280
    %283 = vst.msk [vmem:[#allocation5] sm:$0x1] %vm123, %v282
    // Predicated region
    $region30: #{tpu_custom_call.1} parent=1 // pred_check
      %p284 = pneg %p50
    $region31: #{tpu_custom_call.1} parent=1 // pred_check_branch
      %286 = sbr.rel (%p284) target = $region33
    $region32: #{tpu_custom_call.1} parent=1 // pred_region
      %v287 = vld [vmem:[#allocation2] sm:$0x1]
      %vm288 = vcmask 8192
      %v289 = vsel %vm288, %v287, 0.0
      %290 = vadd.xlane.f32.xlu0 %v289
      %v291 = vpop.xlane.xlu0 %290
      %s292 = vtos %v291
      %v293 = vld [vmem:[#allocation4] sm:$0x1]
      %v294 = vld [vmem:[#allocation5] sm:$0x1]
      %v295 = vmul.f32 %v293, %v294
      %v296 = vmax.f32 %v295, 1e-16
      %v297 = vld [vmem:[#allocation3] sm:$0x1]
      %v298 = vrsqrt.pop %v296
      %v299 = vmul.f32 %v297, %v298
      %v300 = vsel %vm288, %v299, 0.0
      %301 = vadd.xlane.f32.xlu0 %v300
      %v302 = vpop.xlane.xlu0 %301
      %s303 = vtos %v302
      %v304 = vlaneseq
      %v305 = vshrl.u32 %v304, 7
      %vm306 = vcmp.eq.s32.totalorder %v305, 0
      %vm307 = vcmp.eq.s32.totalorder %v99, 1
      %vm308 = vmand %vm306, %vm307
      %v309 = vstv %s303
      %v310 = vsel %vm308, %v309, 0.0
      %vm311 = vcmp.eq.s32.totalorder %v99, 0
      %vm312 = vmand %vm306, %vm311
      %v313 = vstv %s292
      %v314 = vsel %vm312, %v313, %v310
      %315 = vst [vmem:[#allocation12] sm:$0xff] %v314
    $region33: #{tpu_custom_call.1} parent=1 // pred_fallthru
      _
    %p316 = scmp.eq.s32.totalorder 0, 0
    %p317 = pnand %p50, %p316
    %p318 = pneg %p317
    // Predicated region
    $region34: #{tpu_custom_call.1} parent=1 // pred_check
      _
    $region35: #{tpu_custom_call.1} parent=1 // pred_check_branch
      %320 = sbr.rel (%p317) target = $region37
    $region36: #{tpu_custom_call.1} parent=1 // pred_region
      %v321 = vld [vmem:[#allocation11] sm:$0x1]
      %v322 = vlog2.pop %v321
      %v323 = vmul.f32 %v322, 0.6931472
      %v324 = vmax.f32 %v323, -100.0
      %v325 = vsub.f32 0.0, %v324
      %vm326 = vcmask 8192
      %v327 = vsel %vm326, %v325, 0.0
      %328 = vadd.xlane.f32.xlu0 %v327
      %v329 = vpop.xlane.xlu0 %328
      %v330 = vrot.slane %v329, 4
      %v331 = vadd.f32 %v329, %v330
      %v332 = vrot.slane %v331, 2
      %v333 = vadd.f32 %v331, %v332
      %v334 = vrot.slane %v333, 1
      %v335 = vadd.f32 %v333, %v334
      %s336 = vtos %v335
      %v337 = vld [vmem:[#allocation12] sm:$0xff]
      %v338 = vlaneseq
      %v339 = vshrl.u32 %v338, 7
      %vm340 = vcmp.eq.s32.totalorder %v339, 0
      %vm341 = vcmp.eq.s32.totalorder %v99, 2
      %vm342 = vmand %vm340, %vm341
      %v343 = vstv %s336
      %v344 = vsel %vm342, %v343, %v337
      %345 = vst [vmem:[#allocation12] sm:$0xff] %v344
    $region37: #{tpu_custom_call.1} parent=1 // pred_fallthru
      _
    // Predicated region
    $region38: #{tpu_custom_call.1} parent=1 // pred_check
      _
    $region39: #{tpu_custom_call.1} parent=1 // pred_check_branch
      %347 = sbr.rel (0) target = $region41
    $region40: #{tpu_custom_call.1} parent=1 // pred_region
      %s349 = ssub.s32 128, 128
      %350 = vsyncadd [#allocation8], %s349
      %s352 = sshll.u32 [#allocation12], 4
      %s353 = int_to_ptr.vmem [resolvable:$true] %s352
      %355 = dma.vmem_to_hbm [thread:$0]  %s353, 128, %s3, [#allocation8]
    $region41: #{tpu_custom_call.1} parent=1 // pred_fallthru
      _
    // Predicated region
    $region42: #{tpu_custom_call.1} parent=1 // pred_check
      _
    $region43: #{tpu_custom_call.1} parent=1 // pred_check_branch
      %357 = sbr.rel (0) target = $region45
    $region44: #{tpu_custom_call.1} parent=1 // pred_region
      %358 = dma.done [#allocation8], 128
    $region45: #{tpu_custom_call.1} parent=1 // pred_fallthru
      _
    %359 = vsyncpa [#allocation7], 1
    %360 = vsyncpa [#allocation10], 1
    %361 = vsyncpa [#allocation8], 1

</llo_original>
